<compile_context>
chip_gen: v7x
topology: tpu7x:2x2x1
jax: 0.10.0
libtpu: 0.0.40
codegen_flags: <defaults>
</compile_context>

<pallas_src>
import functools

import jax
import jax.numpy as jnp
from jax import lax
from jax.experimental import pallas as pl
from jax.experimental.pallas import tpu as pltpu

_MiB = 1 << 20
# Conservative per-kernel buffer budget: fits the limit we request via vmem_limit_bytes
# on v5e/v6e (128 MiB physical) and leaves headroom on v7x (64 MiB physical per TC).
_VMEM_BUDGET = 24 * _MiB


def _pick_tile_sublane(dim, preferred, itemsize):
    """Sublane-dim tile (rows). Granularity is dtype-aware: 8 f32 / 16 bf16 / 32 int8."""
    gran = max(8, 32 // max(itemsize, 1))
    if dim <= preferred:
        return dim
    t = (preferred // gran) * gran
    while t >= gran:
        if dim % t == 0:
            return t
        t -= gran
    return dim  # full-dim fallback (always legal)


def _pick_tile_lane(dim, preferred):
    """Lane-dim tile: prefer 256-multiples (v6e/v7x MXU width), fall back to 128."""
    if dim <= preferred:
        return dim
    for gran in (256, 128):
        t = (preferred // gran) * gran
        while t >= gran:
            if dim % t == 0:
                return t
            t -= gran
    return dim  # full-dim fallback


def _footprint_bytes(tm, tn, tk, in_itemsize, out_itemsize, use_acc):
    """Double-buffered VMEM footprint estimate for one grid step."""
    buf = 2 * (tm * tk * in_itemsize          # x tile
               + 2 * tn * tk * in_itemsize    # merged weight tile [2, tn, tk]
               + 2 * tn * 4                   # merged bias tile (tiny)
               + 2 * tm * tn * out_itemsize)  # mean + var output tiles
    if use_acc:
        buf += 2 * tm * tn * 4                # f32 accumulators (single-buffered scratch)
    return buf


# --------------------------- kernel bodies ---------------------------------------------

_CONTRACT_K = (((1,), (1,)), ((), ()))  # contract dim 1 of x with dim 1 of each W half


def _kernel_fullk(x_ref, w_ref, b_ref, mean_ref, var_ref):
    """Grid (M, N): full-K matmul, bias + softplus written directly."""
    x = x_ref[...]
    m = lax.dot_general(x, w_ref[0], _CONTRACT_K, preferred_element_type=jnp.float32)
    v = lax.dot_general(x, w_ref[1], _CONTRACT_K, preferred_element_type=jnp.float32)
    mean_ref[...] = (m + b_ref[0].astype(jnp.float32)).astype(mean_ref.dtype)
    var_ref[...] = jax.nn.softplus(v + b_ref[1].astype(jnp.float32)).astype(var_ref.dtype)


def _kernel_kgrid_inplace(x_ref, w_ref, b_ref, mean_ref, var_ref):
    """Grid (M, N, K), f32 outputs: accumulate directly into the resident output tiles."""
    k = pl.program_id(2)

    @pl.when(k == 0)
    def _init():
        mean_ref[...] = jnp.zeros_like(mean_ref)
        var_ref[...] = jnp.zeros_like(var_ref)

    x = x_ref[...]
    mean_ref[...] += lax.dot_general(x, w_ref[0], _CONTRACT_K,
                                     preferred_element_type=jnp.float32)
    var_ref[...] += lax.dot_general(x, w_ref[1], _CONTRACT_K,
                                    preferred_element_type=jnp.float32)

    @pl.when(k == pl.num_programs(2) - 1)
    def _finalize():
        mean_ref[...] = mean_ref[...] + b_ref[0].astype(jnp.float32)
        var_ref[...] = jax.nn.softplus(var_ref[...] + b_ref[1].astype(jnp.float32))


def _kernel_kgrid_acc(x_ref, w_ref, b_ref, mean_ref, var_ref, acc_m, acc_v):
    """Grid (M, N, K), non-f32 outputs: f32 scratch accumulators, downcast at k==last."""
    k = pl.program_id(2)

    @pl.when(k == 0)
    def _init():
        acc_m[...] = jnp.zeros_like(acc_m)
        acc_v[...] = jnp.zeros_like(acc_v)

    x = x_ref[...]
    acc_m[...] += lax.dot_general(x, w_ref[0], _CONTRACT_K,
                                  preferred_element_type=jnp.float32)
    acc_v[...] += lax.dot_general(x, w_ref[1], _CONTRACT_K,
                                  preferred_element_type=jnp.float32)

    @pl.when(k == pl.num_programs(2) - 1)
    def _finalize():
        mean_ref[...] = (acc_m[...] + b_ref[0].astype(jnp.float32)).astype(mean_ref.dtype)
        var_ref[...] = jax.nn.softplus(
            acc_v[...] + b_ref[1].astype(jnp.float32)).astype(var_ref.dtype)


# --------------------------- wrapper ----------------------------------------------------

def gaussian_layer(x, weight, bias, *, tm=512, tn=512, tk=512, compute_dtype=None):
    """x: [B, in]; weight: [2*out, in]; bias: [2*out] -> (mean, var), each [B, out]."""
    B, in_features = x.shape
    two_out, in_w = weight.shape
    assert in_features == in_w and two_out % 2 == 0
    out_features = two_out // 2
    out_dtype = x.dtype

    # Optional bf16 compute path (MXU is bf16-native on v5e/v6e/v7x); accumulation and
    # bias + softplus stay in f32; outputs keep the caller's dtype.
    if compute_dtype is not None:
        x = x.astype(compute_dtype)
        weight = weight.astype(compute_dtype)
    in_itemsize = x.dtype.itemsize
    out_itemsize = jnp.dtype(out_dtype).itemsize

    # ---- tile selection ----
    tm = _pick_tile_sublane(B, tm, in_itemsize)
    m_grid = B // tm

    # v7x megacore: with only one M block, make out/tn >= 2 so both TensorCores get work.
    tn_pref = tn
    if m_grid == 1 and out_features >= 256:
        tn_pref = min(tn_pref, out_features // 2)
    tn = _pick_tile_lane(out_features, tn_pref)

    # Collapse the K grid axis entirely when the full-K working set fits the budget.
    if _footprint_bytes(tm, tn, in_features, in_itemsize, out_itemsize, False) <= _VMEM_BUDGET:
        tk = in_features
    else:
        tk = _pick_tile_lane(in_features, tk)

    use_kgrid = tk < in_features
    inplace = use_kgrid and jnp.dtype(out_dtype) == jnp.dtype(jnp.float32)
    use_acc = use_kgrid and not inplace

    # Shrink tm/tn if the chosen tiles overshoot the budget (robustness for odd shapes).
    for _ in range(8):
        if _footprint_bytes(tm, tn, tk, in_itemsize, out_itemsize, use_acc) <= _VMEM_BUDGET:
            break
        new_tm = _pick_tile_sublane(B, max(tm // 2, 8), in_itemsize) if tm > 8 else tm
        new_tn = _pick_tile_lane(out_features, max(tn // 2, 128)) if tn > 128 else tn
        if new_tm == tm and new_tn == tn:
            break
        tm, tn = new_tm, new_tn

    m_grid = B // tm
    n_grid = out_features // tn
    k_grid = in_features // tk

    # Free, contiguous reshapes — no HBM transpose/copy of the weight per call.
    w2 = weight.reshape(2, out_features, in_features)   # [2, out, in]
    b2 = bias.reshape(2, 1, out_features)                # [2, 1, out]

    cost = pl.CostEstimate(
        flops=2 * B * in_features * two_out,
        transcendentals=2 * B * out_features,            # softplus = exp + log1p
        bytes_accessed=(x.size * x.dtype.itemsize
                        + w2.size * w2.dtype.itemsize
                        + bias.size * bias.dtype.itemsize
                        + 2 * B * out_features * out_itemsize),
    )

    vmem_limit = int(min(
        max(_footprint_bytes(tm, tn, tk, in_itemsize, out_itemsize, use_acc) + 4 * _MiB,
            16 * _MiB),
        48 * _MiB))

    if not use_kgrid:
        grid = (m_grid, n_grid)
        in_specs = [
            pl.BlockSpec((tm, tk), lambda m, n: (m, 0)),            # x (full K)
            pl.BlockSpec((2, tn, tk), lambda m, n: (0, n, 0)),       # both W halves
            pl.BlockSpec((2, 1, tn), lambda m, n: (0, 0, n)),        # both bias halves
        ]
        out_specs = (
            pl.BlockSpec((tm, tn), lambda m, n: (m, n)),             # mean
            pl.BlockSpec((tm, tn), lambda m, n: (m, n)),             # var
        )
        kernel = _kernel_fullk
        scratch = []
        semantics = ("parallel", "parallel")
    else:
        grid = (m_grid, n_grid, k_grid)
        in_specs = [
            pl.BlockSpec((tm, tk), lambda m, n, k: (m, k)),          # x
            pl.BlockSpec((2, tn, tk), lambda m, n, k: (0, n, k)),    # both W halves
            pl.BlockSpec((2, 1, tn), lambda m, n, k: (0, 0, n)),     # both bias halves
        ]
        out_specs = (
            pl.BlockSpec((tm, tn), lambda m, n, k: (m, n)),          # mean
            pl.BlockSpec((tm, tn), lambda m, n, k: (m, n)),          # var
        )
        if inplace:
            kernel = _kernel_kgrid_inplace
            scratch = []
        else:
            kernel = _kernel_kgrid_acc
            scratch = [pltpu.VMEM((tm, tn), jnp.float32),
                       pltpu.VMEM((tm, tn), jnp.float32)]
        semantics = ("parallel", "parallel", "arbitrary")

    mean, var = pl.pallas_call(
        kernel,
        out_shape=(
            jax.ShapeDtypeStruct((B, out_features), out_dtype),
            jax.ShapeDtypeStruct((B, out_features), out_dtype),
        ),
        grid_spec=pltpu.PrefetchScalarGridSpec(
            num_scalar_prefetch=0,
            grid=grid,
            in_specs=in_specs,
            out_specs=out_specs,
            scratch_shapes=scratch,
        ),
        compiler_params=pltpu.CompilerParams(
            dimension_semantics=semantics,
            vmem_limit_bytes=vmem_limit,
        ),
        cost_estimate=cost,
    )(x, w2, b2)
    return mean, var


def _reference(x, weight, bias):
    out = weight.shape[0] // 2
    y = x @ weight.T + bias
    return y[:, :out], jax.nn.softplus(y[:, out:])


if __name__ == "__main__":
    key = jax.random.PRNGKey(0)
    fn = jax.jit(gaussian_layer)
    fn_bf16 = jax.jit(functools.partial(gaussian_layer, compute_dtype=jnp.bfloat16))
    std_init = 0.01  # mirrors DenseLayer.init_params (normal, std=0.01)

    keys = jax.random.split(key, 12)

    # --- 1) small demo shapes consistent with the module (dense layer) ----------------
    B, din, dout = 8, 32, 16
    w = std_init * jax.random.normal(keys[0], (2 * dout, din), jnp.float32)
    b = std_init * jax.random.normal(keys[1], (2 * dout,), jnp.float32)
    x = jax.random.normal(keys[2], (B, din), jnp.float32)
    mean, var = fn(x, w, b)
    jax.block_until_ready((mean, var))
    mr, vr = _reference(x, w, b)
    assert jnp.allclose(mean, mr, atol=1e-5, rtol=1e-5)
    assert jnp.allclose(var, vr, atol=1e-5, rtol=1e-5)

    # --- 2) (M, N) grid with collapsed K (full-K kernel, megacore-friendly N split) ----
    B2, din2, dout2 = 256, 1024, 384
    w2 = std_init * jax.random.normal(keys[3], (2 * dout2, din2), jnp.float32)
    b2 = std_init * jax.random.normal(keys[4], (2 * dout2,), jnp.float32)
    x2 = jax.random.normal(keys[5], (B2, din2), jnp.float32)
    mean2, var2 = fn(x2, w2, b2)
    jax.block_until_ready((mean2, var2))
    mr2, vr2 = _reference(x2, w2, b2)
    assert jnp.allclose(mean2, mr2, atol=1e-4, rtol=1e-4)
    assert jnp.allclose(var2, vr2, atol=1e-4, rtol=1e-4)

    # --- 3) large in_features forces the K-tiled path (in-place f32 accumulation) ------
    B3, din3, dout3 = 512, 4096, 512
    w3 = std_init * jax.random.normal(keys[6], (2 * dout3, din3), jnp.float32)
    b3 = std_init * jax.random.normal(keys[7], (2 * dout3,), jnp.float32)
    x3 = jax.random.normal(keys[8], (B3, din3), jnp.float32)
    mean3, var3 = fn(x3, w3, b3)
    jax.block_until_ready((mean3, var3))
    mr3, vr3 = _reference(x3, w3, b3)
    assert jnp.allclose(mean3, mr3, atol=1e-4, rtol=1e-4)
    assert jnp.allclose(var3, vr3, atol=1e-4, rtol=1e-4)

    # --- 4) bf16 compute path (MXU-native on v5e/v6e/v7x), f32 outputs -----------------
    B4, din4, dout4 = 256, 1024, 256
    w4 = std_init * jax.random.normal(keys[9], (2 * dout4, din4), jnp.float32)
    b4 = std_init * jax.random.normal(keys[10], (2 * dout4,), jnp.float32)
    x4 = jax.random.normal(keys[11], (B4, din4), jnp.float32)
    mean4, var4 = fn_bf16(x4, w4, b4)
    jax.block_until_ready((mean4, var4))
    # Compare against an f32 reference evaluated on the bf16-rounded inputs.
    mr4, vr4 = _reference(x4.astype(jnp.bfloat16).astype(jnp.float32),
                          w4.astype(jnp.bfloat16).astype(jnp.float32), b4)
    assert jnp.allclose(mean4, mr4, atol=1e-3, rtol=1e-3)
    assert jnp.allclose(var4, vr4, atol=1e-3, rtol=1e-3)

    # TODO(synk): full_dependency=True branch (split dim/dim^2, batched L@L.T + eps*I and
    # Cholesky with try/except retry) is not part of this configuration and not implemented.
    print("KERNEL_OK")
</pallas_src>

<mosaic_0001>
module attributes {stable_mosaic.version = 11 : i64} {
  func.func @_kernel_fullk(%arg0: i32, %arg1: i32, %arg2: memref<8x32xf32, #tpu.memory_space<vmem>>, %arg3: memref<2x16x32xf32, #tpu.memory_space<vmem>>, %arg4: memref<2x1x16xf32, #tpu.memory_space<vmem>>, %arg5: memref<8x16xf32, #tpu.memory_space<vmem>>, %arg6: memref<8x16xf32, #tpu.memory_space<vmem>>) attributes {dimension_semantics = [#tpu.dimension_semantics<parallel>, #tpu.dimension_semantics<parallel>], iteration_bounds = array<i64: 1, 1>, scalar_prefetch = 0 : i64, scratch_operands = 0 : i64, tpu.core_type = #tpu.core_type<tc>, window_params = [{transform_indices = @transform_0, window_bounds = array<i64: 8, 32>}, {transform_indices = @transform_1, window_bounds = array<i64: 2, 16, 32>}, {transform_indices = @transform_2, window_bounds = array<i64: 2, 1, 16>}, {transform_indices = @transform_3, window_bounds = array<i64: 8, 16>}, {transform_indices = @transform_4, window_bounds = array<i64: 8, 16>}]} {
    %c0 = arith.constant 0 : index
    %c0_0 = arith.constant 0 : index
    %0 = vector.load %arg2[%c0, %c0_0] : memref<8x32xf32, #tpu.memory_space<vmem>>, vector<8x32xf32>
    %c0_1 = arith.constant 0 : index
    %c0_2 = arith.constant 0 : index
    %c0_3 = arith.constant 0 : index
    %1 = vector.load %arg3[%c0_1, %c0_2, %c0_3] : memref<2x16x32xf32, #tpu.memory_space<vmem>>, vector<1x16x32xf32>
    %2 = vector.shape_cast %1 : vector<1x16x32xf32> to vector<16x32xf32>
    %cst = arith.constant dense<0.000000e+00> : vector<8x16xf32>
    %3 = tpu.matmul %0, %2, %cst {dimension_numbers = #tpu.dot_dimension_numbers<[1], [1], [0], [0], [0, 0, 1, 0], [], []>} : vector<8x32xf32>, vector<16x32xf32>, vector<8x16xf32> -> vector<8x16xf32>
    %c1 = arith.constant 1 : index
    %c0_4 = arith.constant 0 : index
    %c0_5 = arith.constant 0 : index
    %4 = vector.load %arg3[%c1, %c0_4, %c0_5] : memref<2x16x32xf32, #tpu.memory_space<vmem>>, vector<1x16x32xf32>
    %5 = vector.shape_cast %4 : vector<1x16x32xf32> to vector<16x32xf32>
    %cst_6 = arith.constant dense<0.000000e+00> : vector<8x16xf32>
    %6 = tpu.matmul %0, %5, %cst_6 {dimension_numbers = #tpu.dot_dimension_numbers<[1], [1], [0], [0], [0, 0, 1, 0], [], []>} : vector<8x32xf32>, vector<16x32xf32>, vector<8x16xf32> -> vector<8x16xf32>
    %c0_7 = arith.constant 0 : index
    %c0_8 = arith.constant 0 : index
    %c0_9 = arith.constant 0 : index
    %7 = vector.load %arg4[%c0_7, %c0_8, %c0_9] : memref<2x1x16xf32, #tpu.memory_space<vmem>>, vector<1x1x16xf32>
    %8 = vector.shape_cast %7 : vector<1x1x16xf32> to vector<1x16xf32>
    %9 = vector.broadcast %8 : vector<1x16xf32> to vector<8x16xf32>
    %10 = arith.addf %3, %9 : vector<8x16xf32>
    %c0_10 = arith.constant 0 : index
    %c0_11 = arith.constant 0 : index
    %11 = vector.load %arg5[%c0_10, %c0_11] : memref<8x16xf32, #tpu.memory_space<vmem>>, vector<8x16xf32>
    tpu.vector_store %arg5[%c0_10, %c0_11], %10 {strides = array<i32>} : memref<8x16xf32, #tpu.memory_space<vmem>>, vector<8x16xf32>,
    %c1_12 = arith.constant 1 : index
    %c0_13 = arith.constant 0 : index
    %c0_14 = arith.constant 0 : index
    %12 = vector.load %arg4[%c1_12, %c0_13, %c0_14] : memref<2x1x16xf32, #tpu.memory_space<vmem>>, vector<1x1x16xf32>
    %13 = vector.shape_cast %12 : vector<1x1x16xf32> to vector<1x16xf32>
    %14 = vector.broadcast %13 : vector<1x16xf32> to vector<8x16xf32>
    %15 = arith.addf %6, %14 : vector<8x16xf32>
    %cst_15 = arith.constant 0.000000e+00 : f32
    %16 = vector.broadcast %cst_15 : f32 to vector<8x16xf32>
    %17 = arith.maximumf %15, %16 : vector<8x16xf32>
    %18 = vector.broadcast %cst_15 : f32 to vector<8x16xf32>
    %19 = arith.subf %15, %18 : vector<8x16xf32>
    %20 = arith.cmpf one, %19, %19 : vector<8x16xf32>
    %21 = vector.broadcast %cst_15 : f32 to vector<8x16xf32>
    %22 = arith.addf %15, %21 : vector<8x16xf32>
    %23 = math.absf %19 : vector<8x16xf32>
    %cst_16 = arith.constant 0.000000e+00 : f32
    %24 = vector.broadcast %cst_16 : f32 to vector<8x16xf32>
    %25 = arith.subf %24, %23 : vector<8x16xf32>
    %26 = math.exp %25 : vector<8x16xf32>
    %27 = math.log1p %26 : vector<8x16xf32>
    %28 = arith.addf %17, %27 : vector<8x16xf32>
    %29 = arith.select %20, %22, %28 : vector<8x16xi1>, vector<8x16xf32>
    %c0_17 = arith.constant 0 : index
    %c0_18 = arith.constant 0 : index
    %30 = vector.load %arg6[%c0_17, %c0_18] : memref<8x16xf32, #tpu.memory_space<vmem>>, vector<8x16xf32>
    tpu.vector_store %arg6[%c0_17, %c0_18], %29 {strides = array<i32>} : memref<8x16xf32, #tpu.memory_space<vmem>>, vector<8x16xf32>,
    return
  }
  func.func @transform_0(%arg0: i32, %arg1: i32) -> (i32, i32) {
    %c0_i32 = arith.constant 0 : i32
    %c0_i32_0 = arith.constant 0 : i32
    return %arg0, %c0_i32 : i32, i32
  }
  func.func @transform_1(%arg0: i32, %arg1: i32) -> (i32, i32, i32) {
    %c0_i32 = arith.constant 0 : i32
    %c0_i32_0 = arith.constant 0 : i32
    %c0_i32_1 = arith.constant 0 : i32
    return %c0_i32, %arg1, %c0_i32_0 : i32, i32, i32
  }
  func.func @transform_2(%arg0: i32, %arg1: i32) -> (i32, i32, i32) {
    %c0_i32 = arith.constant 0 : i32
    %c0_i32_0 = arith.constant 0 : i32
    %c0_i32_1 = arith.constant 0 : i32
    return %c0_i32, %c0_i32_0, %arg1 : i32, i32, i32
  }
  func.func @transform_3(%arg0: i32, %arg1: i32) -> (i32, i32) {
    %c0_i32 = arith.constant 0 : i32
    return %arg0, %arg1 : i32, i32
  }
  func.func @transform_4(%arg0: i32, %arg1: i32) -> (i32, i32) {
    %c0_i32 = arith.constant 0 : i32
    return %arg0, %arg1 : i32, i32
  }
}

</mosaic_0001>

<llo_original>
// kernel: gaussian_layer.1
$region0: #{gaussian_layer.1}
  #allocation0 [shape = 'u32[]', space=smem, size = 0x4, offset = 0x4, fixed_abs, tag = 'smem constant byte address 0x4 - core index']
  #allocation1 [shape = 'u32[144,128]{1,0:T(1,128)}', space=vmem, size = 0x12000, scoped, tag = 'internal scratch']
  %s0 = inlined_call_operand.vmem [shape: f32[8,32], index: 0, kind: input, shape index: {}]
  %s1 = inlined_call_operand.hbm [shape: f32[2,16,32], index: 1, kind: input, shape index: {}]
  %s2 = inlined_call_operand.vmem [shape: f32[2,1,16], index: 2, kind: input, shape index: {}]
  %s3 = inlined_call_operand.hbm [shape: f32[8,16], index: 3, kind: output, shape index: {0}]
  %s4 = inlined_call_operand.hbm [shape: f32[8,16], index: 4, kind: output, shape index: {1}]
  %5 = xla_tuple %s3, %s4
  %s6 = sld [smem:[#allocation0]]
  $region34: #{gaussian_layer.1} parent=0
    _
  %s8 = ssub.s32 1, %s6
  %s9 = scalar_select 0, %s8, %s6
  $region1: #{gaussian_layer.1} parent=0
    #allocation2 [shape = 'u8[16384]{0}', space=vmem, size = 0x4000, scoped, tag = 'input window, operand 1, single buffered']
    #allocation3 [shape = 's32[1]{0}', space=sflag, size = 0x4, scoped, tag = 'scoped memory for gaussian_layer.1']
    #allocation4 [shape = 's32[1]{0}', space=sflag, size = 0x4, scoped, tag = 'scoped memory for gaussian_layer.1']
    #allocation5 [shape = 'u8[4096]{0}', space=vmem, size = 0x1000, scoped, tag = 'output window, operand 0, single buffered']
    #allocation6 [shape = 'u8[4096]{0}', space=vmem, size = 0x1000, scoped, tag = 'output window, operand 1, single buffered']
    #allocation7 [shape = 's32[1]{0}', space=sflag, size = 0x4, scoped, tag = 'scoped memory for gaussian_layer.1']
    %10 = vsyncpa [#allocation3], 0
    %11 = vsyncpa [#allocation4], 0
    %12 = vsyncpa [#allocation7], 0
    // Predicated region
    $region2: #{gaussian_layer.1} parent=1 // pred_check
      _
    $region3: #{gaussian_layer.1} parent=1 // pred_check_branch
      %14 = sbr.rel (0) target = $region5
    $region4: #{gaussian_layer.1} parent=1 // pred_region
      _
    $region5: #{gaussian_layer.1} parent=1 // pred_fallthru
      _
    // Predicated region
    $region6: #{gaussian_layer.1} parent=1 // pred_check
      _
    $region7: #{gaussian_layer.1} parent=1 // pred_check_branch
      %16 = sbr.rel (0) target = $region9
    $region8: #{gaussian_layer.1} parent=1 // pred_region
      %s18 = ssub.s32 512, 512
      %19 = vsyncadd [#allocation3], %s18
      %s20 = sshll.u32 [#allocation2], 4
      %s21 = int_to_ptr.vmem [resolvable:$true] %s20
      %26 = dma.hbm_to_vmem [thread:$0]  %s1, 512, %s21, [#allocation3], 128, 128, 8
    $region9: #{gaussian_layer.1} parent=1 // pred_fallthru
      _
    // Predicated region
    $region10: #{gaussian_layer.1} parent=1 // pred_check
      _
    $region11: #{gaussian_layer.1} parent=1 // pred_check_branch
      %28 = sbr.rel (0) target = $region13
    $region12: #{gaussian_layer.1} parent=1 // pred_region
      _
    $region13: #{gaussian_layer.1} parent=1 // pred_fallthru
      _
    // Predicated region
    $region14: #{gaussian_layer.1} parent=1 // pred_check
      _
    $region15: #{gaussian_layer.1} parent=1 // pred_check_branch
      %30 = sbr.rel (0) target = $region17
    $region16: #{gaussian_layer.1} parent=1 // pred_region
      %31 = dma.done [#allocation3], 512
    $region17: #{gaussian_layer.1} parent=1 // pred_fallthru
      _
    %v32 = vld [vmem:[%s0] sm:$0xff]
    %v33 = vld [vmem:[#allocation2] sm:$0xff]
    %v34 = vld [vmem:[#allocation2 + $0x8] sm:$0xff]
    %s35 = scalar_lea.vmem [#allocation2], 16
    %v36 = vld [vmem:[%s35] sm:$0xff]
    %v37 = vld [vmem:[%s35 + $0x8] sm:$0xff]
    %v38 = vld [vmem:[%s2] sm:$0x1]
    %v40 = vlaneseq
    %v41 = vshrl.u32 %v40, 7
    %v42 = vsub.s32 0, %v41
    %v43 = vrot.slane %v38, %v42
    %vm45 = vcmask 261120
    %v47 = vsel %vm45, %v32, 0
    %v50 = vsel %vm45, %v33, 0
    %v53 = vsel %vm45, %v34, 0
    %55 = vmatprep.subr.mxu0 0.0
    %56 = vmatpush1.xpose.msra.mxu0 %v50
    %57 = vmatprep.subr.mxu0 0.0
    %58 = vmatpush1.xpose.msra.mxu0 %v53
    %59 = vmatprep.subr.mxu0 0.0
    %60 = vmatpush1.xpose.msra.mxu0 0.0
    %61 = vmatprep.subr.mxu0 0.0
    %62 = vmatpush1.xpose.msra.mxu0 0.0
    %63 = vmatprep.subr.mxu0 0.0
    %64 = vmatpush1.xpose.msra.mxu0 0.0
    %65 = vmatprep.subr.mxu0 0.0
    %66 = vmatpush1.xpose.msra.mxu0 0.0
    %67 = vmatprep.subr.mxu0 0.0
    %68 = vmatpush1.xpose.msra.mxu0 0.0
    %69 = vmatprep.subr.mxu0 0.0
    %70 = vmatpush1.xpose.msra.mxu0 0.0
    %71 = vmatprep.subr.mxu0 0.0
    %72 = vmatpush1.xpose.msra.mxu0 0.0
    %73 = vmatprep.subr.mxu0 0.0
    %74 = vmatpush1.xpose.msra.mxu0 0.0
    %75 = vmatprep.subr.mxu0 0.0
    %76 = vmatpush1.xpose.msra.mxu0 0.0
    %77 = vmatprep.subr.mxu0 0.0
    %78 = vmatpush1.xpose.msra.mxu0 0.0
    %79 = vmatprep.subr.mxu0 0.0
    %80 = vmatpush1.xpose.msra.mxu0 0.0
    %81 = vmatprep.subr.mxu0 0.0
    %82 = vmatpush1.xpose.msra.mxu0 0.0
    %83 = vmatprep.subr.mxu0 0.0
    %84 = vmatpush1.xpose.msra.mxu0 0.0
    %85 = vmatprep.subr.mxu0 0.0
    %86 = vmatpush1.xpose.msra.mxu0 0.0
    %87 = vmatprep.subr.mxu0 0.0
    %88 = vmatpush1.xpose.msra.mxu0 0.0
    %89 = vmatprep.subr.mxu0 0.0
    %90 = vmatpush1.xpose.msra.mxu0 0.0
    %91 = vmatprep.subr.mxu0 0.0
    %92 = vmatpush1.xpose.msra.mxu0 0.0
    %93 = vmatprep.subr.mxu0 0.0
    %94 = vmatpush1.xpose.msra.mxu0 0.0
    %95 = vmatprep.subr.mxu0 0.0
    %96 = vmatpush1.xpose.msra.mxu0 0.0
    %97 = vmatprep.subr.mxu0 0.0
    %98 = vmatpush1.xpose.msra.mxu0 0.0
    %99 = vmatprep.subr.mxu0 0.0
    %100 = vmatpush1.xpose.msra.mxu0 0.0
    %101 = vmatprep.subr.mxu0 0.0
    %102 = vmatpush1.xpose.msra.mxu0 0.0
    %103 = vmatprep.subr.mxu0 0.0
    %104 = vmatpush1.xpose.msra.mxu0 0.0
    %105 = vmatprep.subr.mxu0 0.0
    %106 = vmatpush1.xpose.msra.mxu0 0.0
    %107 = vmatprep.subr.mxu0 0.0
    %108 = vmatpush1.xpose.msra.mxu0 0.0
    %109 = vmatprep.subr.mxu0 0.0
    %110 = vmatpush1.xpose.msra.mxu0 0.0
    %111 = vmatprep.subr.mxu0 0.0
    %112 = vmatpush1.xpose.msra.mxu0 0.0
    %113 = vmatprep.subr.mxu0 0.0
    %114 = vmatpush1.xpose.msra.mxu0 0.0
    %115 = vmatprep.subr.mxu0 0.0
    %116 = vmatpush1.xpose.msra.mxu0 0.0
    %117 = vmatprep.subr.mxu0 0.0
    %118 = vmatpush1.xpose.msra.mxu0 0.0
    %119 = vmatprep.mubr.f32.mxu0 0.0
    %120 = vmatmul.mubr.f32.gmra.mrb[0].mxu0 %v47
    %v121 = vpop.f32.mrb[0].mxu0
    %v122 = vadd.f32 %v43, %v121
    %v123 = vpop.f32.mrb[0].mxu0
    %124 = vdwg.mxu0
    %vm125 = vcmask 130048
    %126 = vst.msk [vmem:[#allocation5] sm:$0xff] %vm125, %v122
    %s127 = scalar_lea.vmem %s2, 1
    %v128 = vld [vmem:[%s127] sm:$0x1]
    %v130 = vlaneseq
    %v131 = vshrl.u32 %v130, 7
    %v132 = vsub.s32 0, %v131
    %v133 = vrot.slane %v128, %v132
    %v136 = vsel %vm45, %v36, 0
    %v139 = vsel %vm45, %v37, 0
    %141 = vmatprep.subr.mxu0 0.0
    %142 = vmatpush1.xpose.msra.mxu0 %v136
    %143 = vmatprep.subr.mxu0 0.0
    %144 = vmatpush1.xpose.msra.mxu0 %v139
    %145 = vmatprep.subr.mxu0 0.0
    %146 = vmatpush1.xpose.msra.mxu0 0.0
    %147 = vmatprep.subr.mxu0 0.0
    %148 = vmatpush1.xpose.msra.mxu0 0.0
    %149 = vmatprep.subr.mxu0 0.0
    %150 = vmatpush1.xpose.msra.mxu0 0.0
    %151 = vmatprep.subr.mxu0 0.0
    %152 = vmatpush1.xpose.msra.mxu0 0.0
    %153 = vmatprep.subr.mxu0 0.0
    %154 = vmatpush1.xpose.msra.mxu0 0.0
    %155 = vmatprep.subr.mxu0 0.0
    %156 = vmatpush1.xpose.msra.mxu0 0.0
    %157 = vmatprep.subr.mxu0 0.0
    %158 = vmatpush1.xpose.msra.mxu0 0.0
    %159 = vmatprep.subr.mxu0 0.0
    %160 = vmatpush1.xpose.msra.mxu0 0.0
    %161 = vmatprep.subr.mxu0 0.0
    %162 = vmatpush1.xpose.msra.mxu0 0.0
    %163 = vmatprep.subr.mxu0 0.0
    %164 = vmatpush1.xpose.msra.mxu0 0.0
    %165 = vmatprep.subr.mxu0 0.0
    %166 = vmatpush1.xpose.msra.mxu0 0.0
    %167 = vmatprep.subr.mxu0 0.0
    %168 = vmatpush1.xpose.msra.mxu0 0.0
    %169 = vmatprep.subr.mxu0 0.0
    %170 = vmatpush1.xpose.msra.mxu0 0.0
    %171 = vmatprep.subr.mxu0 0.0
    %172 = vmatpush1.xpose.msra.mxu0 0.0
    %173 = vmatprep.subr.mxu0 0.0
    %174 = vmatpush1.xpose.msra.mxu0 0.0
    %175 = vmatprep.subr.mxu0 0.0
    %176 = vmatpush1.xpose.msra.mxu0 0.0
    %177 = vmatprep.subr.mxu0 0.0
    %178 = vmatpush1.xpose.msra.mxu0 0.0
    %179 = vmatprep.subr.mxu0 0.0
    %180 = vmatpush1.xpose.msra.mxu0 0.0
    %181 = vmatprep.subr.mxu0 0.0
    %182 = vmatpush1.xpose.msra.mxu0 0.0
    %183 = vmatprep.subr.mxu0 0.0
    %184 = vmatpush1.xpose.msra.mxu0 0.0
    %185 = vmatprep.subr.mxu0 0.0
    %186 = vmatpush1.xpose.msra.mxu0 0.0
    %187 = vmatprep.subr.mxu0 0.0
    %188 = vmatpush1.xpose.msra.mxu0 0.0
    %189 = vmatprep.subr.mxu0 0.0
    %190 = vmatpush1.xpose.msra.mxu0 0.0
    %191 = vmatprep.subr.mxu0 0.0
    %192 = vmatpush1.xpose.msra.mxu0 0.0
    %193 = vmatprep.subr.mxu0 0.0
    %194 = vmatpush1.xpose.msra.mxu0 0.0
    %195 = vmatprep.subr.mxu0 0.0
    %196 = vmatpush1.xpose.msra.mxu0 0.0
    %197 = vmatprep.subr.mxu0 0.0
    %198 = vmatpush1.xpose.msra.mxu0 0.0
    %199 = vmatprep.subr.mxu0 0.0
    %200 = vmatpush1.xpose.msra.mxu0 0.0
    %201 = vmatprep.subr.mxu0 0.0
    %202 = vmatpush1.xpose.msra.mxu0 0.0
    %203 = vmatprep.subr.mxu0 0.0
    %204 = vmatpush1.xpose.msra.mxu0 0.0
    %205 = vmatprep.mubr.f32.mxu0 0.0
    %206 = vmatmul.mubr.f32.gmra.mrb[0].mxu0 %v47
    %v207 = vpop.f32.mrb[0].mxu0
    %v208 = vadd.f32 %v133, %v207
    %v209 = vpop.f32.mrb[0].mxu0
    %210 = vdwg.mxu0
    %v211 = vmax.f32 %v208, 0.0
    %vm212 = vcmp.ne.f32.partialorder %v208, %v208
    %v213 = vadd.f32 %v208, 0.0
    %v214 = vand.u32 2147483647, %v208
    %v215 = vsub.f32 0.0, %v214
    %v216 = vmul.f32 %v215, 1.442695
    %v217 = vpow.pop %v216
    %v218 = vadd.f32 %v217, 1.0
    %v219 = vlog2.pop %v218
    %v220 = vmul.f32 %v219, 0.6931472
    %v221 = vmul.f32 -0.5, %v217
    %v222 = vadd.f32 %v221, 1.0
    %v223 = vmul.f32 %v222, %v217
    %v224 = vand.u32 2147483647, %v217
    %vm225 = vcmp.lt.f32.partialorder %v224, 0.0004427343
    %v226 = vsel %vm225, %v223, %v220
    %v227 = vadd.f32 %v211, %v226
    %v228 = vsel %vm212, %v213, %v227
    %229 = vst.msk [vmem:[#allocation6] sm:$0xff] %vm125, %v228
    // Predicated region
    $region18: #{gaussian_layer.1} parent=1 // pred_check
      _
    $region19: #{gaussian_layer.1} parent=1 // pred_check_branch
      %231 = sbr.rel (0) target = $region21
    $region20: #{gaussian_layer.1} parent=1 // pred_region
      %s233 = ssub.s32 128, 128
      %234 = vsyncadd [#allocation4], %s233
      %s236 = sshll.u32 [#allocation5], 4
      %s237 = int_to_ptr.vmem [resolvable:$true] %s236
      %239 = dma.vmem_to_hbm [thread:$0]  %s237, 128, %s3, [#allocation4]
    $region21: #{gaussian_layer.1} parent=1 // pred_fallthru
      _
    // Predicated region
    $region22: #{gaussian_layer.1} parent=1 // pred_check
      _
    $region23: #{gaussian_layer.1} parent=1 // pred_check_branch
      %241 = sbr.rel (0) target = $region25
    $region24: #{gaussian_layer.1} parent=1 // pred_region
      %s243 = ssub.s32 128, 128
      %244 = vsyncadd [#allocation7], %s243
      %s246 = sshll.u32 [#allocation6], 4
      %s247 = int_to_ptr.vmem [resolvable:$true] %s246
      %249 = dma.vmem_to_hbm [thread:$0]  %s247, 128, %s4, [#allocation7]
    $region25: #{gaussian_layer.1} parent=1 // pred_fallthru
      _
    // Predicated region
    $region26: #{gaussian_layer.1} parent=1 // pred_check
      _
    $region27: #{gaussian_layer.1} parent=1 // pred_check_branch
      %251 = sbr.rel (0) target = $region29
    $region28: #{gaussian_layer.1} parent=1 // pred_region
      %252 = dma.done [#allocation4], 128
    $region29: #{gaussian_layer.1} parent=1 // pred_fallthru
      _
    // Predicated region
    $region30: #{gaussian_layer.1} parent=1 // pred_check
      _
    $region31: #{gaussian_layer.1} parent=1 // pred_check_branch
      %254 = sbr.rel (0) target = $region33
    $region32: #{gaussian_layer.1} parent=1 // pred_region
      %255 = dma.done [#allocation7], 128
    $region33: #{gaussian_layer.1} parent=1 // pred_fallthru
      _
    %256 = vsyncpa [#allocation3], 1
    %257 = vsyncpa [#allocation4], 1
    %258 = vsyncpa [#allocation7], 1

</llo_original>
